<compile_context>
chip_gen: v7x
topology: tpu7x:2x2x1
jax: 0.10.0
libtpu: 0.0.40
codegen_flags: <defaults>
</compile_context>

<pallas_src>
import math

import jax
import jax.numpy as jnp
from jax.experimental import pallas as pl
from jax.experimental.pallas import tpu as pltpu


_TILE_BYTES_TARGET = 8 << 20       # ~8 MiB per block per operand
_VMEM_LIMIT_BYTES = 48 << 20       # 2x double-buffered 8 MiB blocks + headroom
_SPLIT_THRESHOLD_BYTES = 2 << 20   # only force >=2 grid blocks above this size


# --------------------------------------------------------------------------
# Fast path: aliased no-op kernel (reshape never needed to move data).
# --------------------------------------------------------------------------
def _noop_kernel(x_ref, o_ref):
    # Output buffer is aliased to the input buffer; nothing to do.
    del x_ref, o_ref


def reshape_flatten(x: jax.Array) -> jax.Array:
    """Pallas equivalent of `x.reshape(x.size(0), -1)` (zero-copy path)."""
    n = x.shape[0]
    flat = math.prod(x.shape[1:]) if x.ndim > 1 else 1

    # Metadata-only, row-major merge of trailing dims (matches torch.reshape).
    x2 = jnp.reshape(x, (n, flat))

    return pl.pallas_call(
        _noop_kernel,
        out_shape=jax.ShapeDtypeStruct((n, flat), x.dtype),
        in_specs=[pl.BlockSpec(memory_space=pl.ANY)],
        out_specs=pl.BlockSpec(memory_space=pl.ANY),
        input_output_aliases={0: 0},
    )(x2)


# --------------------------------------------------------------------------
# Materializing path: lane/sublane-dense tiled copy.
# --------------------------------------------------------------------------
def _copy_kernel(x_ref, o_ref):
    # Plain unmasked VMEM tile copy (flatten already happened in the wrapper).
    o_ref[...] = x_ref[...]


def _sublane_multiple(dtype) -> int:
    # Native sublane packing: 8 rows (4-byte), 16 (2-byte), 32 (1-byte).
    itemsize = jnp.dtype(dtype).itemsize
    return max(8, 32 // max(itemsize, 1))


def _pick_tile(dim: int, multiple: int, max_tile: int) -> int:
    """Full dim if it fits, else the largest multiple of `multiple` <= max_tile."""
    if dim <= max_tile:
        return dim  # full-extent block — always legal w.r.t. the (8,128) rule
    return max((max_tile // multiple) * multiple, multiple)


def _plan_slab(total: int, dtype):
    """Factor `total` as (R, F) with R % sub == 0 and F % 128 == 0, or None."""
    sub = _sublane_multiple(dtype)
    native = sub * 128
    if total <= 0 or total % native != 0:
        return None
    n_tiles = total // native
    # Lane width: largest b*128 <= 4096 with b dividing n_tiles (prefer wide rows).
    b = 1
    for cand in range(min(n_tiles, 32), 0, -1):
        if n_tiles % cand == 0:
            b = cand
            break
    f = b * 128
    r = (n_tiles // b) * sub
    return r, f


def _tiled_copy_2d(x2d: jax.Array) -> jax.Array:
    r, f = x2d.shape
    dtype = x2d.dtype
    itemsize = jnp.dtype(dtype).itemsize
    sub = _sublane_multiple(dtype)

    tile_f = _pick_tile(f, 128, 8192)
    rows_target = max(sub, _TILE_BYTES_TARGET // max(tile_f * itemsize, 1))
    tile_r = _pick_tile(r, sub, max(sub, (rows_target // sub) * sub))

    # Guarantee >=2 grid blocks for large inputs so v7x's two TCs both work.
    if (r * f * itemsize >= _SPLIT_THRESHOLD_BYTES
            and pl.cdiv(r, tile_r) * pl.cdiv(f, tile_f) < 2):
        if tile_r >= 2 * sub:
            tile_r = ((tile_r // 2) // sub) * sub
        elif tile_f >= 256:
            tile_f = ((tile_f // 2) // 128) * 128

    grid = (pl.cdiv(r, tile_r), pl.cdiv(f, tile_f))

    return pl.pallas_call(
        _copy_kernel,
        out_shape=jax.ShapeDtypeStruct((r, f), dtype),
        grid=grid,
        in_specs=[pl.BlockSpec((tile_r, tile_f), lambda i, j: (i, j))],
        out_specs=pl.BlockSpec((tile_r, tile_f), lambda i, j: (i, j)),
        compiler_params=pltpu.CompilerParams(
            dimension_semantics=("parallel", "parallel"),
            vmem_limit_bytes=_VMEM_LIMIT_BYTES,
        ),
        cost_estimate=pl.CostEstimate(
            flops=0,
            transcendentals=0,
            bytes_accessed=2 * r * f * itemsize,
        ),
    )(x2d)


def reshape_flatten_copy(x: jax.Array) -> jax.Array:
    """Same semantics as reshape_flatten, but materializes a fresh buffer."""
    n = x.shape[0]
    flat = math.prod(x.shape[1:]) if x.ndim > 1 else 1
    total = n * flat

    slab = _plan_slab(total, x.dtype)
    if slab is not None:
        r, f = slab
        y = _tiled_copy_2d(jnp.reshape(x, (r, f)))   # dense slab view (free)
    else:
        y = _tiled_copy_2d(jnp.reshape(x, (n, flat)))
    return jnp.reshape(y, (n, flat))                  # metadata-only


if __name__ == "__main__":
    key = jax.random.PRNGKey(0)
    # Small NCHW shape consistent with a typical conv activation.
    x = jax.random.normal(key, (2, 4, 16, 16), dtype=jnp.float32)

    # Reference: same semantics as torch.Tensor.reshape(x.size(0), -1).
    y_ref = jnp.reshape(x, (x.shape[0], -1))

    # Fast (aliased no-op) path.
    y = jax.block_until_ready(reshape_flatten(x))
    assert y.shape == (2, 4 * 16 * 16), y.shape
    assert jnp.array_equal(y, y_ref), "mismatch vs reference (no-op path)"

    # Materializing (tiled copy) path.
    y2 = jax.block_until_ready(reshape_flatten_copy(x))
    assert y2.shape == (2, 4 * 16 * 16), y2.shape
    assert jnp.array_equal(y2, y_ref), "mismatch vs reference (copy path)"

    # Typical usage: under jit the aliased no-op is completely free.
    y3 = jax.block_until_ready(jax.jit(reshape_flatten)(x))
    assert jnp.array_equal(y3, y_ref), "mismatch vs reference (jit path)"

    print("KERNEL_OK")
</pallas_src>

<mosaic_0001>
module attributes {stable_mosaic.version = 11 : i64} {
  func.func @_noop_kernel(%arg0: memref<2x1024xf32, #tpu.memory_space<any>>, %arg1: memref<2x1024xf32, #tpu.memory_space<any>>) attributes {dimension_semantics = [], scalar_prefetch = 0 : i64, scratch_operands = 0 : i64, tpu.core_type = #tpu.core_type<tc>} {
    return
  }
}

</mosaic_0001>

<llo_original>
// kernel: tpu_custom_call.1
$region0: #{tpu_custom_call.1}
  #allocation0 [shape = 'u32[]', space=smem, size = 0x4, offset = 0x4, fixed_abs, tag = 'smem constant byte address 0x4 - core index']
  #allocation1 [shape = 'u32[144,128]{1,0:T(1,128)}', space=vmem, size = 0x12000, scoped, tag = 'internal scratch']
  %s0 = inlined_call_operand.hbm [shape: f32[2,1024], index: 0, kind: input, shape index: {}, may-alias: {0,1}]
  %s1 = inlined_call_operand.hbm [shape: f32[2,1024], index: 1, kind: output, shape index: {}, may-alias: {0,1}]
  %s2 = sld [smem:[#allocation0]]
  $region2: #{tpu_custom_call.1} parent=0
    _
  %s4 = ssub.s32 1, %s2
  %s5 = scalar_select 0, %s4, %s2

</llo_original>
